<compile_context>
chip_gen: v7x
topology: tpu7x:2x2x1
jax: 0.10.0
libtpu: 0.0.40
codegen_flags: <defaults>
</compile_context>

<pallas_src>
import math

import jax
import jax.numpy as jnp
from jax.experimental import pallas as pl
from jax.experimental.pallas import tpu as pltpu


def make_pe_tables(Z, H, W, dmodel):
    """__init__-time table math (deterministic, plain JAX glue, runs once)."""
    div_term = jnp.exp(
        jnp.arange(0, dmodel, 2, dtype=jnp.float32)
        * -(math.log(10000.0) / dmodel))

    def table(n):
        pos = jnp.linspace(0.0, 1.0, n).astype(jnp.float32)            # (n,)
        arg = pos[:, None] * div_term[None, :] * math.pi                # (n, D/2)
        pe = jnp.zeros((n, dmodel), jnp.float32)
        pe = pe.at[:, 0::2].set(jnp.sin(arg))
        pe = pe.at[:, 1::2].set(jnp.cos(arg))
        return pe.T                                                     # (D, n)

    return table(Z), table(H), table(W)


def _make_pe_kernel(D, Z, HW, z_chunk):
    """Kernel writing z-chunk `i` of the lane-dense (3*D, Z*HW) pe slab."""

    def kernel(pez_ref, slab_hw_ref, out_ref):
        # pez_ref:     (D, Z)            pe_z table (grid-invariant, tiny)
        # slab_hw_ref: (2*D, HW)         stacked h-third + w-third z-invariant slab
        # out_ref:     (3*D, z_chunk*HW) current lane-dense output block
        slab_hw = slab_hw_ref[...]                                      # (2D, HW)
        i = pl.program_id(0)
        for z in range(z_chunk):  # static unroll; all out slices static & 128-aligned
            if z_chunk == Z:
                col = pez_ref[:, z:z + 1]                               # static slice
            else:
                # Tiled (production-size) path: dynamic column of the tiny table.
                col = pez_ref[:, pl.ds(i * z_chunk + z, 1)]             # (D, 1)
            out_ref[0:D, z * HW:(z + 1) * HW] = jnp.broadcast_to(col, (D, HW))
            out_ref[D:3 * D, z * HW:(z + 1) * HW] = slab_hw

    return kernel


def init_sinusoidal_pe_3d(Z, H, W, dmodel=32):
    """Build the pe buffer (1, 3*dmodel, Z, H, W) once (PyTorch __init__)."""
    assert dmodel % 8 == 0, "dmodel must be a multiple of 8 (sublane rule, even sin/cos fill)"
    D = dmodel
    HW = H * W

    pez, peh, pew = make_pe_tables(Z, H, W, D)        # (D,Z), (D,H), (D,W)
    # Merged z-invariant slab for the h- and w-thirds (tiny: 2*D*H*W floats).
    slab_h = jnp.repeat(peh, W, axis=1)               # (D, H*W): peh[d, h] at h*W+w
    slab_w = jnp.tile(pew, (1, H))                    # (D, H*W): pew[d, w] at h*W+w
    slab_hw = jnp.concatenate([slab_h, slab_w], axis=0)   # (2*D, H*W)

    # Lane-dim tiling: cap each output block at ~4 MiB so the double-buffered
    # out block stays far below v7x's 64 MiB VMEM.  At small dims (e.g. the
    # test shapes: 768 KiB total) this yields z_chunk == Z -> grid=(1,)
    # single-shot, the cheapest configuration for this fixed-overhead kernel.
    bytes_per_z = 3 * D * HW * 4
    z_chunk = max(1, min(Z, (4 * 1024 * 1024) // max(1, bytes_per_z)))
    while Z % z_chunk != 0:
        z_chunk -= 1
    grid = (Z // z_chunk,)

    flat = pl.pallas_call(
        _make_pe_kernel(D, Z, HW, z_chunk),
        out_shape=jax.ShapeDtypeStruct((3 * D, Z * HW), jnp.float32),
        grid=grid,
        in_specs=[
            # Grid-invariant KB-scale tables: fetched once, no re-DMA per step.
            pl.BlockSpec((D, Z), lambda i: (0, 0)),
            pl.BlockSpec((2 * D, HW), lambda i: (0, 0)),
        ],
        out_specs=pl.BlockSpec((3 * D, z_chunk * HW), lambda i: (0, i)),
        compiler_params=pltpu.CompilerParams(
            dimension_semantics=("parallel",)),      # independent output blocks
    )(pez, slab_hw)

    return flat.reshape(1, 3 * D, Z, H, W)            # free contiguous reshape


def sinusoidal_positional_encoding_3d_forward(pe, x):
    """Forward pass: pe.expand(batch, -1, -1, -1, -1)."""
    B = x.shape[0]
    # TODO(synk): returning the broadcast materializes B copies in HBM; in a
    # real pipeline keep pe as (1, ...) and let the downstream add broadcast
    # lazily inside the consumer's jit (PyTorch .expand is a view).
    return jnp.broadcast_to(pe, (B,) + pe.shape[1:])


if __name__ == "__main__":
    B, C, Z, H, W, dmodel = 2, 4, 8, 16, 16, 32

    key = jax.random.PRNGKey(0)
    x = jax.random.normal(key, (B, C, Z, H, W), dtype=jnp.float32)

    # __init__-time buffer build (Pallas kernel), then the trivial forward.
    pe = init_sinusoidal_pe_3d(Z, H, W, dmodel)
    out = sinusoidal_positional_encoding_3d_forward(pe, x)
    out = jax.block_until_ready(out)

    # Pure-JAX reference for a correctness check.
    pez, peh, pew = make_pe_tables(Z, H, W, dmodel)
    ref = jnp.concatenate(
        [
            jnp.broadcast_to(pez[:, :, None, None], (dmodel, Z, H, W)),
            jnp.broadcast_to(peh[:, None, :, None], (dmodel, Z, H, W)),
            jnp.broadcast_to(pew[:, None, None, :], (dmodel, Z, H, W)),
        ],
        axis=0,
    )[None]
    ref = jnp.broadcast_to(ref, (B, 3 * dmodel, Z, H, W))

    assert out.shape == (B, 3 * dmodel, Z, H, W)
    assert out.dtype == jnp.float32
    assert bool(jnp.allclose(out, ref, atol=1e-6))

    print("KERNEL_OK")
</pallas_src>

<mosaic_0001>
module attributes {stable_mosaic.version = 11 : i64} {
  func.func @kernel(%arg0: i32, %arg1: memref<32x8xf32, #tpu.memory_space<vmem>>, %arg2: memref<64x256xf32, #tpu.memory_space<vmem>>, %arg3: memref<96x2048xf32, #tpu.memory_space<vmem>>) attributes {dimension_semantics = [#tpu.dimension_semantics<parallel>], iteration_bounds = array<i64: 1>, scalar_prefetch = 0 : i64, scratch_operands = 0 : i64, tpu.core_type = #tpu.core_type<tc>, window_params = [{pipeline_mode = #tpu.pipeline_mode<synchronous>, transform_indices = @transform_0, window_bounds = array<i64: 32, 8>}, {pipeline_mode = #tpu.pipeline_mode<synchronous>, transform_indices = @transform_1, window_bounds = array<i64: 64, 256>}, {transform_indices = @transform_2, window_bounds = array<i64: 96, 2048>}]} {
    %c0 = arith.constant 0 : index
    %c0_0 = arith.constant 0 : index
    %0 = vector.load %arg2[%c0, %c0_0] : memref<64x256xf32, #tpu.memory_space<vmem>>, vector<64x256xf32>
    %c0_1 = arith.constant 0 : index
    %c0_2 = arith.constant 0 : index
    %1 = vector.load %arg1[%c0_1, %c0_2] : memref<32x8xf32, #tpu.memory_space<vmem>>, vector<32x1xf32>
    %2 = vector.shape_cast %1 : vector<32x1xf32> to vector<32x1xf32>
    %3 = vector.broadcast %2 : vector<32x1xf32> to vector<32x256xf32>
    %c0_3 = arith.constant 0 : index
    %c0_4 = arith.constant 0 : index
    %4 = vector.load %arg3[%c0_3, %c0_4] : memref<96x2048xf32, #tpu.memory_space<vmem>>, vector<32x256xf32>
    tpu.vector_store %arg3[%c0_3, %c0_4], %3 {strides = array<i32>} : memref<96x2048xf32, #tpu.memory_space<vmem>>, vector<32x256xf32>,
    %c32 = arith.constant 32 : index
    %c0_5 = arith.constant 0 : index
    %5 = vector.load %arg3[%c32, %c0_5] : memref<96x2048xf32, #tpu.memory_space<vmem>>, vector<64x256xf32>
    tpu.vector_store %arg3[%c32, %c0_5], %0 {strides = array<i32>} : memref<96x2048xf32, #tpu.memory_space<vmem>>, vector<64x256xf32>,
    %c0_6 = arith.constant 0 : index
    %c1 = arith.constant 1 : index
    %6 = vector.load %arg1[%c0_6, %c1] : memref<32x8xf32, #tpu.memory_space<vmem>>, vector<32x1xf32>
    %7 = vector.shape_cast %6 : vector<32x1xf32> to vector<32x1xf32>
    %8 = vector.broadcast %7 : vector<32x1xf32> to vector<32x256xf32>
    %c0_7 = arith.constant 0 : index
    %c256 = arith.constant 256 : index
    %9 = vector.load %arg3[%c0_7, %c256] : memref<96x2048xf32, #tpu.memory_space<vmem>>, vector<32x256xf32>
    tpu.vector_store %arg3[%c0_7, %c256], %8 {strides = array<i32>} : memref<96x2048xf32, #tpu.memory_space<vmem>>, vector<32x256xf32>,
    %c32_8 = arith.constant 32 : index
    %c256_9 = arith.constant 256 : index
    %10 = vector.load %arg3[%c32_8, %c256_9] : memref<96x2048xf32, #tpu.memory_space<vmem>>, vector<64x256xf32>
    tpu.vector_store %arg3[%c32_8, %c256_9], %0 {strides = array<i32>} : memref<96x2048xf32, #tpu.memory_space<vmem>>, vector<64x256xf32>,
    %c0_10 = arith.constant 0 : index
    %c2 = arith.constant 2 : index
    %11 = vector.load %arg1[%c0_10, %c2] : memref<32x8xf32, #tpu.memory_space<vmem>>, vector<32x1xf32>
    %12 = vector.shape_cast %11 : vector<32x1xf32> to vector<32x1xf32>
    %13 = vector.broadcast %12 : vector<32x1xf32> to vector<32x256xf32>
    %c0_11 = arith.constant 0 : index
    %c512 = arith.constant 512 : index
    %14 = vector.load %arg3[%c0_11, %c512] : memref<96x2048xf32, #tpu.memory_space<vmem>>, vector<32x256xf32>
    tpu.vector_store %arg3[%c0_11, %c512], %13 {strides = array<i32>} : memref<96x2048xf32, #tpu.memory_space<vmem>>, vector<32x256xf32>,
    %c32_12 = arith.constant 32 : index
    %c512_13 = arith.constant 512 : index
    %15 = vector.load %arg3[%c32_12, %c512_13] : memref<96x2048xf32, #tpu.memory_space<vmem>>, vector<64x256xf32>
    tpu.vector_store %arg3[%c32_12, %c512_13], %0 {strides = array<i32>} : memref<96x2048xf32, #tpu.memory_space<vmem>>, vector<64x256xf32>,
    %c0_14 = arith.constant 0 : index
    %c3 = arith.constant 3 : index
    %16 = vector.load %arg1[%c0_14, %c3] : memref<32x8xf32, #tpu.memory_space<vmem>>, vector<32x1xf32>
    %17 = vector.shape_cast %16 : vector<32x1xf32> to vector<32x1xf32>
    %18 = vector.broadcast %17 : vector<32x1xf32> to vector<32x256xf32>
    %c0_15 = arith.constant 0 : index
    %c768 = arith.constant 768 : index
    %19 = vector.load %arg3[%c0_15, %c768] : memref<96x2048xf32, #tpu.memory_space<vmem>>, vector<32x256xf32>
    tpu.vector_store %arg3[%c0_15, %c768], %18 {strides = array<i32>} : memref<96x2048xf32, #tpu.memory_space<vmem>>, vector<32x256xf32>,
    %c32_16 = arith.constant 32 : index
    %c768_17 = arith.constant 768 : index
    %20 = vector.load %arg3[%c32_16, %c768_17] : memref<96x2048xf32, #tpu.memory_space<vmem>>, vector<64x256xf32>
    tpu.vector_store %arg3[%c32_16, %c768_17], %0 {strides = array<i32>} : memref<96x2048xf32, #tpu.memory_space<vmem>>, vector<64x256xf32>,
    %c0_18 = arith.constant 0 : index
    %c4 = arith.constant 4 : index
    %21 = vector.load %arg1[%c0_18, %c4] : memref<32x8xf32, #tpu.memory_space<vmem>>, vector<32x1xf32>
    %22 = vector.shape_cast %21 : vector<32x1xf32> to vector<32x1xf32>
    %23 = vector.broadcast %22 : vector<32x1xf32> to vector<32x256xf32>
    %c0_19 = arith.constant 0 : index
    %c1024 = arith.constant 1024 : index
    %24 = vector.load %arg3[%c0_19, %c1024] : memref<96x2048xf32, #tpu.memory_space<vmem>>, vector<32x256xf32>
    tpu.vector_store %arg3[%c0_19, %c1024], %23 {strides = array<i32>} : memref<96x2048xf32, #tpu.memory_space<vmem>>, vector<32x256xf32>,
    %c32_20 = arith.constant 32 : index
    %c1024_21 = arith.constant 1024 : index
    %25 = vector.load %arg3[%c32_20, %c1024_21] : memref<96x2048xf32, #tpu.memory_space<vmem>>, vector<64x256xf32>
    tpu.vector_store %arg3[%c32_20, %c1024_21], %0 {strides = array<i32>} : memref<96x2048xf32, #tpu.memory_space<vmem>>, vector<64x256xf32>,
    %c0_22 = arith.constant 0 : index
    %c5 = arith.constant 5 : index
    %26 = vector.load %arg1[%c0_22, %c5] : memref<32x8xf32, #tpu.memory_space<vmem>>, vector<32x1xf32>
    %27 = vector.shape_cast %26 : vector<32x1xf32> to vector<32x1xf32>
    %28 = vector.broadcast %27 : vector<32x1xf32> to vector<32x256xf32>
    %c0_23 = arith.constant 0 : index
    %c1280 = arith.constant 1280 : index
    %29 = vector.load %arg3[%c0_23, %c1280] : memref<96x2048xf32, #tpu.memory_space<vmem>>, vector<32x256xf32>
    tpu.vector_store %arg3[%c0_23, %c1280], %28 {strides = array<i32>} : memref<96x2048xf32, #tpu.memory_space<vmem>>, vector<32x256xf32>,
    %c32_24 = arith.constant 32 : index
    %c1280_25 = arith.constant 1280 : index
    %30 = vector.load %arg3[%c32_24, %c1280_25] : memref<96x2048xf32, #tpu.memory_space<vmem>>, vector<64x256xf32>
    tpu.vector_store %arg3[%c32_24, %c1280_25], %0 {strides = array<i32>} : memref<96x2048xf32, #tpu.memory_space<vmem>>, vector<64x256xf32>,
    %c0_26 = arith.constant 0 : index
    %c6 = arith.constant 6 : index
    %31 = vector.load %arg1[%c0_26, %c6] : memref<32x8xf32, #tpu.memory_space<vmem>>, vector<32x1xf32>
    %32 = vector.shape_cast %31 : vector<32x1xf32> to vector<32x1xf32>
    %33 = vector.broadcast %32 : vector<32x1xf32> to vector<32x256xf32>
    %c0_27 = arith.constant 0 : index
    %c1536 = arith.constant 1536 : index
    %34 = vector.load %arg3[%c0_27, %c1536] : memref<96x2048xf32, #tpu.memory_space<vmem>>, vector<32x256xf32>
    tpu.vector_store %arg3[%c0_27, %c1536], %33 {strides = array<i32>} : memref<96x2048xf32, #tpu.memory_space<vmem>>, vector<32x256xf32>,
    %c32_28 = arith.constant 32 : index
    %c1536_29 = arith.constant 1536 : index
    %35 = vector.load %arg3[%c32_28, %c1536_29] : memref<96x2048xf32, #tpu.memory_space<vmem>>, vector<64x256xf32>
    tpu.vector_store %arg3[%c32_28, %c1536_29], %0 {strides = array<i32>} : memref<96x2048xf32, #tpu.memory_space<vmem>>, vector<64x256xf32>,
    %c0_30 = arith.constant 0 : index
    %c7 = arith.constant 7 : index
    %36 = vector.load %arg1[%c0_30, %c7] : memref<32x8xf32, #tpu.memory_space<vmem>>, vector<32x1xf32>
    %37 = vector.shape_cast %36 : vector<32x1xf32> to vector<32x1xf32>
    %38 = vector.broadcast %37 : vector<32x1xf32> to vector<32x256xf32>
    %c0_31 = arith.constant 0 : index
    %c1792 = arith.constant 1792 : index
    %39 = vector.load %arg3[%c0_31, %c1792] : memref<96x2048xf32, #tpu.memory_space<vmem>>, vector<32x256xf32>
    tpu.vector_store %arg3[%c0_31, %c1792], %38 {strides = array<i32>} : memref<96x2048xf32, #tpu.memory_space<vmem>>, vector<32x256xf32>,
    %c32_32 = arith.constant 32 : index
    %c1792_33 = arith.constant 1792 : index
    %40 = vector.load %arg3[%c32_32, %c1792_33] : memref<96x2048xf32, #tpu.memory_space<vmem>>, vector<64x256xf32>
    tpu.vector_store %arg3[%c32_32, %c1792_33], %0 {strides = array<i32>} : memref<96x2048xf32, #tpu.memory_space<vmem>>, vector<64x256xf32>,
    return
  }
  func.func @transform_0(%arg0: i32) -> (i32, i32) {
    %c0_i32 = arith.constant 0 : i32
    %c0_i32_0 = arith.constant 0 : i32
    %c0_i32_1 = arith.constant 0 : i32
    return %c0_i32, %c0_i32_0 : i32, i32
  }
  func.func @transform_1(%arg0: i32) -> (i32, i32) {
    %c0_i32 = arith.constant 0 : i32
    %c0_i32_0 = arith.constant 0 : i32
    %c0_i32_1 = arith.constant 0 : i32
    return %c0_i32, %c0_i32_0 : i32, i32
  }
  func.func @transform_2(%arg0: i32) -> (i32, i32) {
    %c0_i32 = arith.constant 0 : i32
    %c0_i32_0 = arith.constant 0 : i32
    return %c0_i32, %arg0 : i32, i32
  }
}

</mosaic_0001>

<llo_original>
// kernel: tpu_custom_call.1
$region0: #{tpu_custom_call.1}
  #allocation0 [shape = 'u32[]', space=smem, size = 0x4, offset = 0x4, fixed_abs, tag = 'smem constant byte address 0x4 - core index']
  #allocation1 [shape = 'u32[144,128]{1,0:T(1,128)}', space=vmem, size = 0x12000, scoped, tag = 'internal scratch']
  %s0 = inlined_call_operand.vmem [shape: f32[32,8], index: 0, kind: input, shape index: {}]
  %s1 = inlined_call_operand.hbm [shape: f32[64,256], index: 1, kind: input, shape index: {}]
  %s2 = inlined_call_operand.hbm [shape: f32[96,2048], index: 2, kind: output, shape index: {}]
  %s3 = sld [smem:[#allocation0]]
  $region22: #{tpu_custom_call.1} parent=0
    _
  %s5 = ssub.s32 1, %s3
  %s6 = scalar_select 0, %s5, %s3
  $region1: #{tpu_custom_call.1} parent=0
    #allocation2 [shape = 'u8[65536]{0}', space=vmem, size = 0x10000, scoped, tag = 'input window, operand 1, single buffered']
    #allocation3 [shape = 's32[1]{0}', space=sflag, size = 0x4, scoped, tag = 'scoped memory for tpu_custom_call.1']
    #allocation4 [shape = 's32[1]{0}', space=sflag, size = 0x4, scoped, tag = 'scoped memory for tpu_custom_call.1']
    #allocation5 [shape = 'u8[786432]{0}', space=vmem, size = 0xc0000, scoped, tag = 'output window, operand 0, single buffered']
    %7 = vsyncpa [#allocation3], 0
    %8 = vsyncpa [#allocation4], 0
    // Predicated region
    $region2: #{tpu_custom_call.1} parent=1 // pred_check
      _
    $region3: #{tpu_custom_call.1} parent=1 // pred_check_branch
      %10 = sbr.rel (0) target = $region5
    $region4: #{tpu_custom_call.1} parent=1 // pred_region
      _
    $region5: #{tpu_custom_call.1} parent=1 // pred_fallthru
      _
    // Predicated region
    $region6: #{tpu_custom_call.1} parent=1 // pred_check
      _
    $region7: #{tpu_custom_call.1} parent=1 // pred_check_branch
      %12 = sbr.rel (0) target = $region9
    $region8: #{tpu_custom_call.1} parent=1 // pred_region
      %s14 = ssub.s32 2048, 2048
      %15 = vsyncadd [#allocation3], %s14
      %s16 = sshll.u32 [#allocation2], 4
      %s17 = int_to_ptr.vmem [resolvable:$true] %s16
      %22 = dma.hbm_to_vmem [thread:$0]  %s1, 2048, %s17, [#allocation3], 256, 256, 16
    $region9: #{tpu_custom_call.1} parent=1 // pred_fallthru
      _
    // Predicated region
    $region10: #{tpu_custom_call.1} parent=1 // pred_check
      _
    $region11: #{tpu_custom_call.1} parent=1 // pred_check_branch
      %24 = sbr.rel (0) target = $region13
    $region12: #{tpu_custom_call.1} parent=1 // pred_region
      %25 = dma.done [#allocation3], 2048
    $region13: #{tpu_custom_call.1} parent=1 // pred_fallthru
      _
    %v26 = vld [vmem:[#allocation2] sm:$0xff]
    %v27 = vld [vmem:[#allocation2 + $0x8] sm:$0xff]
    %v28 = vld [vmem:[#allocation2 + $0x10] sm:$0xff]
    %v29 = vld [vmem:[#allocation2 + $0x18] sm:$0xff]
    %v30 = vld [vmem:[#allocation2 + $0x20] sm:$0xff]
    %v31 = vld [vmem:[#allocation2 + $0x28] sm:$0xff]
    %v32 = vld [vmem:[#allocation2 + $0x30] sm:$0xff]
    %v33 = vld [vmem:[#allocation2 + $0x38] sm:$0xff]
    %v34 = vld [vmem:[#allocation2 + $0x40] sm:$0xff]
    %v35 = vld [vmem:[#allocation2 + $0x48] sm:$0xff]
    %v36 = vld [vmem:[#allocation2 + $0x50] sm:$0xff]
    %v37 = vld [vmem:[#allocation2 + $0x58] sm:$0xff]
    %v38 = vld [vmem:[#allocation2 + $0x60] sm:$0xff]
    %v39 = vld [vmem:[#allocation2 + $0x68] sm:$0xff]
    %v40 = vld [vmem:[#allocation2 + $0x70] sm:$0xff]
    %v41 = vld [vmem:[#allocation2 + $0x78] sm:$0xff]
    %v42 = vld [vmem:[%s0] sm:$0xff]
    %v43 = vld [vmem:[%s0 + $0x8] sm:$0xff]
    %v44 = vld [vmem:[%s0 + $0x10] sm:$0xff]
    %v45 = vld [vmem:[%s0 + $0x18] sm:$0xff]
    %47 = vset.pattern.permute.xlu0 0
    %48 = vperm.xlu0 %47, %v42
    %v49 = vpop.permute.xlu0 %48
    %52 = vset.pattern.permute.xlu0 0
    %53 = vperm.xlu0 %52, %v43
    %v54 = vpop.permute.xlu0 %53
    %57 = vset.pattern.permute.xlu0 0
    %58 = vperm.xlu0 %57, %v44
    %v59 = vpop.permute.xlu0 %58
    %62 = vset.pattern.permute.xlu0 0
    %63 = vperm.xlu0 %62, %v45
    %v64 = vpop.permute.xlu0 %63
    %66 = vst [vmem:[#allocation5] sm:$0xff] %v49
    %67 = vst [vmem:[#allocation5 + $0x8] sm:$0xff] %v49
    %68 = vst [vmem:[#allocation5 + $0x80] sm:$0xff] %v54
    %69 = vst [vmem:[#allocation5 + $0x88] sm:$0xff] %v54
    %70 = vst [vmem:[#allocation5 + $0x100] sm:$0xff] %v59
    %71 = vst [vmem:[#allocation5 + $0x108] sm:$0xff] %v59
    %72 = vst [vmem:[#allocation5 + $0x180] sm:$0xff] %v64
    %73 = vst [vmem:[#allocation5 + $0x188] sm:$0xff] %v64
    %74 = vst [vmem:[#allocation5 + $0x200] sm:$0xff] %v26
    %75 = vst [vmem:[#allocation5 + $0x208] sm:$0xff] %v27
    %76 = vst [vmem:[#allocation5 + $0x280] sm:$0xff] %v28
    %77 = vst [vmem:[#allocation5 + $0x288] sm:$0xff] %v29
    %78 = vst [vmem:[#allocation5 + $0x300] sm:$0xff] %v30
    %79 = vst [vmem:[#allocation5 + $0x308] sm:$0xff] %v31
    %80 = vst [vmem:[#allocation5 + $0x380] sm:$0xff] %v32
    %81 = vst [vmem:[#allocation5 + $0x388] sm:$0xff] %v33
    %82 = vst [vmem:[#allocation5 + $0x400] sm:$0xff] %v34
    %83 = vst [vmem:[#allocation5 + $0x408] sm:$0xff] %v35
    %84 = vst [vmem:[#allocation5 + $0x480] sm:$0xff] %v36
    %85 = vst [vmem:[#allocation5 + $0x488] sm:$0xff] %v37
    %86 = vst [vmem:[#allocation5 + $0x500] sm:$0xff] %v38
    %87 = vst [vmem:[#allocation5 + $0x508] sm:$0xff] %v39
    %88 = vst [vmem:[#allocation5 + $0x580] sm:$0xff] %v40
    %89 = vst [vmem:[#allocation5 + $0x588] sm:$0xff] %v41
    %v90 = vld [vmem:[%s0] sm:$0xff]
    %v91 = vld [vmem:[%s0 + $0x8] sm:$0xff]
    %v92 = vld [vmem:[%s0 + $0x10] sm:$0xff]
    %v93 = vld [vmem:[%s0 + $0x18] sm:$0xff]
    %95 = vset.pattern.permute.xlu0 1
    %96 = vperm.xlu0 %95, %v90
    %v97 = vpop.permute.xlu0 %96
    %100 = vset.pattern.permute.xlu0 1
    %101 = vperm.xlu0 %100, %v91
    %v102 = vpop.permute.xlu0 %101
    %105 = vset.pattern.permute.xlu0 1
    %106 = vperm.xlu0 %105, %v92
    %v107 = vpop.permute.xlu0 %106
    %110 = vset.pattern.permute.xlu0 1
    %111 = vperm.xlu0 %110, %v93
    %v112 = vpop.permute.xlu0 %111
    %114 = vst [vmem:[#allocation5 + $0x10] sm:$0xff] %v97
    %115 = vst [vmem:[#allocation5 + $0x18] sm:$0xff] %v97
    %116 = vst [vmem:[#allocation5 + $0x90] sm:$0xff] %v102
    %117 = vst [vmem:[#allocation5 + $0x98] sm:$0xff] %v102
    %118 = vst [vmem:[#allocation5 + $0x110] sm:$0xff] %v107
    %119 = vst [vmem:[#allocation5 + $0x118] sm:$0xff] %v107
    %120 = vst [vmem:[#allocation5 + $0x190] sm:$0xff] %v112
    %121 = vst [vmem:[#allocation5 + $0x198] sm:$0xff] %v112
    %122 = vst [vmem:[#allocation5 + $0x210] sm:$0xff] %v26
    %123 = vst [vmem:[#allocation5 + $0x218] sm:$0xff] %v27
    %124 = vst [vmem:[#allocation5 + $0x290] sm:$0xff] %v28
    %125 = vst [vmem:[#allocation5 + $0x298] sm:$0xff] %v29
    %126 = vst [vmem:[#allocation5 + $0x310] sm:$0xff] %v30
    %127 = vst [vmem:[#allocation5 + $0x318] sm:$0xff] %v31
    %128 = vst [vmem:[#allocation5 + $0x390] sm:$0xff] %v32
    %129 = vst [vmem:[#allocation5 + $0x398] sm:$0xff] %v33
    %130 = vst [vmem:[#allocation5 + $0x410] sm:$0xff] %v34
    %131 = vst [vmem:[#allocation5 + $0x418] sm:$0xff] %v35
    %132 = vst [vmem:[#allocation5 + $0x490] sm:$0xff] %v36
    %133 = vst [vmem:[#allocation5 + $0x498] sm:$0xff] %v37
    %134 = vst [vmem:[#allocation5 + $0x510] sm:$0xff] %v38
    %135 = vst [vmem:[#allocation5 + $0x518] sm:$0xff] %v39
    %136 = vst [vmem:[#allocation5 + $0x590] sm:$0xff] %v40
    %137 = vst [vmem:[#allocation5 + $0x598] sm:$0xff] %v41
    %v138 = vld [vmem:[%s0] sm:$0xff]
    %v139 = vld [vmem:[%s0 + $0x8] sm:$0xff]
    %v140 = vld [vmem:[%s0 + $0x10] sm:$0xff]
    %v141 = vld [vmem:[%s0 + $0x18] sm:$0xff]
    %143 = vset.pattern.permute.xlu0 2
    %144 = vperm.xlu0 %143, %v138
    %v145 = vpop.permute.xlu0 %144
    %148 = vset.pattern.permute.xlu0 2
    %149 = vperm.xlu0 %148, %v139
    %v150 = vpop.permute.xlu0 %149
    %153 = vset.pattern.permute.xlu0 2
    %154 = vperm.xlu0 %153, %v140
    %v155 = vpop.permute.xlu0 %154
    %158 = vset.pattern.permute.xlu0 2
    %159 = vperm.xlu0 %158, %v141
    %v160 = vpop.permute.xlu0 %159
    %162 = vst [vmem:[#allocation5 + $0x20] sm:$0xff] %v145
    %163 = vst [vmem:[#allocation5 + $0x28] sm:$0xff] %v145
    %164 = vst [vmem:[#allocation5 + $0xa0] sm:$0xff] %v150
    %165 = vst [vmem:[#allocation5 + $0xa8] sm:$0xff] %v150
    %166 = vst [vmem:[#allocation5 + $0x120] sm:$0xff] %v155
    %167 = vst [vmem:[#allocation5 + $0x128] sm:$0xff] %v155
    %168 = vst [vmem:[#allocation5 + $0x1a0] sm:$0xff] %v160
    %169 = vst [vmem:[#allocation5 + $0x1a8] sm:$0xff] %v160
    %170 = vst [vmem:[#allocation5 + $0x220] sm:$0xff] %v26
    %171 = vst [vmem:[#allocation5 + $0x228] sm:$0xff] %v27
    %172 = vst [vmem:[#allocation5 + $0x2a0] sm:$0xff] %v28
    %173 = vst [vmem:[#allocation5 + $0x2a8] sm:$0xff] %v29
    %174 = vst [vmem:[#allocation5 + $0x320] sm:$0xff] %v30
    %175 = vst [vmem:[#allocation5 + $0x328] sm:$0xff] %v31
    %176 = vst [vmem:[#allocation5 + $0x3a0] sm:$0xff] %v32
    %177 = vst [vmem:[#allocation5 + $0x3a8] sm:$0xff] %v33
    %178 = vst [vmem:[#allocation5 + $0x420] sm:$0xff] %v34
    %179 = vst [vmem:[#allocation5 + $0x428] sm:$0xff] %v35
    %180 = vst [vmem:[#allocation5 + $0x4a0] sm:$0xff] %v36
    %181 = vst [vmem:[#allocation5 + $0x4a8] sm:$0xff] %v37
    %182 = vst [vmem:[#allocation5 + $0x520] sm:$0xff] %v38
    %183 = vst [vmem:[#allocation5 + $0x528] sm:$0xff] %v39
    %184 = vst [vmem:[#allocation5 + $0x5a0] sm:$0xff] %v40
    %185 = vst [vmem:[#allocation5 + $0x5a8] sm:$0xff] %v41
    %v186 = vld [vmem:[%s0] sm:$0xff]
    %v187 = vld [vmem:[%s0 + $0x8] sm:$0xff]
    %v188 = vld [vmem:[%s0 + $0x10] sm:$0xff]
    %v189 = vld [vmem:[%s0 + $0x18] sm:$0xff]
    %191 = vset.pattern.permute.xlu0 3
    %192 = vperm.xlu0 %191, %v186
    %v193 = vpop.permute.xlu0 %192
    %196 = vset.pattern.permute.xlu0 3
    %197 = vperm.xlu0 %196, %v187
    %v198 = vpop.permute.xlu0 %197
    %201 = vset.pattern.permute.xlu0 3
    %202 = vperm.xlu0 %201, %v188
    %v203 = vpop.permute.xlu0 %202
    %206 = vset.pattern.permute.xlu0 3
    %207 = vperm.xlu0 %206, %v189
    %v208 = vpop.permute.xlu0 %207
    %210 = vst [vmem:[#allocation5 + $0x30] sm:$0xff] %v193
    %211 = vst [vmem:[#allocation5 + $0x38] sm:$0xff] %v193
    %212 = vst [vmem:[#allocation5 + $0xb0] sm:$0xff] %v198
    %213 = vst [vmem:[#allocation5 + $0xb8] sm:$0xff] %v198
    %214 = vst [vmem:[#allocation5 + $0x130] sm:$0xff] %v203
    %215 = vst [vmem:[#allocation5 + $0x138] sm:$0xff] %v203
    %216 = vst [vmem:[#allocation5 + $0x1b0] sm:$0xff] %v208
    %217 = vst [vmem:[#allocation5 + $0x1b8] sm:$0xff] %v208
    %218 = vst [vmem:[#allocation5 + $0x230] sm:$0xff] %v26
    %219 = vst [vmem:[#allocation5 + $0x238] sm:$0xff] %v27
    %220 = vst [vmem:[#allocation5 + $0x2b0] sm:$0xff] %v28
    %221 = vst [vmem:[#allocation5 + $0x2b8] sm:$0xff] %v29
    %222 = vst [vmem:[#allocation5 + $0x330] sm:$0xff] %v30
    %223 = vst [vmem:[#allocation5 + $0x338] sm:$0xff] %v31
    %224 = vst [vmem:[#allocation5 + $0x3b0] sm:$0xff] %v32
    %225 = vst [vmem:[#allocation5 + $0x3b8] sm:$0xff] %v33
    %226 = vst [vmem:[#allocation5 + $0x430] sm:$0xff] %v34
    %227 = vst [vmem:[#allocation5 + $0x438] sm:$0xff] %v35
    %228 = vst [vmem:[#allocation5 + $0x4b0] sm:$0xff] %v36
    %229 = vst [vmem:[#allocation5 + $0x4b8] sm:$0xff] %v37
    %230 = vst [vmem:[#allocation5 + $0x530] sm:$0xff] %v38
    %231 = vst [vmem:[#allocation5 + $0x538] sm:$0xff] %v39
    %232 = vst [vmem:[#allocation5 + $0x5b0] sm:$0xff] %v40
    %233 = vst [vmem:[#allocation5 + $0x5b8] sm:$0xff] %v41
    %v234 = vld [vmem:[%s0] sm:$0xff]
    %v235 = vld [vmem:[%s0 + $0x8] sm:$0xff]
    %v236 = vld [vmem:[%s0 + $0x10] sm:$0xff]
    %v237 = vld [vmem:[%s0 + $0x18] sm:$0xff]
    %239 = vset.pattern.permute.xlu0 4
    %240 = vperm.xlu0 %239, %v234
    %v241 = vpop.permute.xlu0 %240
    %244 = vset.pattern.permute.xlu0 4
    %245 = vperm.xlu0 %244, %v235
    %v246 = vpop.permute.xlu0 %245
    %249 = vset.pattern.permute.xlu0 4
    %250 = vperm.xlu0 %249, %v236
    %v251 = vpop.permute.xlu0 %250
    %254 = vset.pattern.permute.xlu0 4
    %255 = vperm.xlu0 %254, %v237
    %v256 = vpop.permute.xlu0 %255
    %258 = vst [vmem:[#allocation5 + $0x40] sm:$0xff] %v241
    %259 = vst [vmem:[#allocation5 + $0x48] sm:$0xff] %v241
    %260 = vst [vmem:[#allocation5 + $0xc0] sm:$0xff] %v246
    %261 = vst [vmem:[#allocation5 + $0xc8] sm:$0xff] %v246
    %262 = vst [vmem:[#allocation5 + $0x140] sm:$0xff] %v251
    %263 = vst [vmem:[#allocation5 + $0x148] sm:$0xff] %v251
    %264 = vst [vmem:[#allocation5 + $0x1c0] sm:$0xff] %v256
    %265 = vst [vmem:[#allocation5 + $0x1c8] sm:$0xff] %v256
    %266 = vst [vmem:[#allocation5 + $0x240] sm:$0xff] %v26
    %267 = vst [vmem:[#allocation5 + $0x248] sm:$0xff] %v27
    %268 = vst [vmem:[#allocation5 + $0x2c0] sm:$0xff] %v28
    %269 = vst [vmem:[#allocation5 + $0x2c8] sm:$0xff] %v29
    %270 = vst [vmem:[#allocation5 + $0x340] sm:$0xff] %v30
    %271 = vst [vmem:[#allocation5 + $0x348] sm:$0xff] %v31
    %272 = vst [vmem:[#allocation5 + $0x3c0] sm:$0xff] %v32
    %273 = vst [vmem:[#allocation5 + $0x3c8] sm:$0xff] %v33
    %274 = vst [vmem:[#allocation5 + $0x440] sm:$0xff] %v34
    %275 = vst [vmem:[#allocation5 + $0x448] sm:$0xff] %v35
    %276 = vst [vmem:[#allocation5 + $0x4c0] sm:$0xff] %v36
    %277 = vst [vmem:[#allocation5 + $0x4c8] sm:$0xff] %v37
    %278 = vst [vmem:[#allocation5 + $0x540] sm:$0xff] %v38
    %279 = vst [vmem:[#allocation5 + $0x548] sm:$0xff] %v39
    %280 = vst [vmem:[#allocation5 + $0x5c0] sm:$0xff] %v40
    %281 = vst [vmem:[#allocation5 + $0x5c8] sm:$0xff] %v41
    %v282 = vld [vmem:[%s0] sm:$0xff]
    %v283 = vld [vmem:[%s0 + $0x8] sm:$0xff]
    %v284 = vld [vmem:[%s0 + $0x10] sm:$0xff]
    %v285 = vld [vmem:[%s0 + $0x18] sm:$0xff]
    %287 = vset.pattern.permute.xlu0 5
    %288 = vperm.xlu0 %287, %v282
    %v289 = vpop.permute.xlu0 %288
    %292 = vset.pattern.permute.xlu0 5
    %293 = vperm.xlu0 %292, %v283
    %v294 = vpop.permute.xlu0 %293
    %297 = vset.pattern.permute.xlu0 5
    %298 = vperm.xlu0 %297, %v284
    %v299 = vpop.permute.xlu0 %298
    %302 = vset.pattern.permute.xlu0 5
    %303 = vperm.xlu0 %302, %v285
    %v304 = vpop.permute.xlu0 %303
    %306 = vst [vmem:[#allocation5 + $0x50] sm:$0xff] %v289
    %307 = vst [vmem:[#allocation5 + $0x58] sm:$0xff] %v289
    %308 = vst [vmem:[#allocation5 + $0xd0] sm:$0xff] %v294
    %309 = vst [vmem:[#allocation5 + $0xd8] sm:$0xff] %v294
    %310 = vst [vmem:[#allocation5 + $0x150] sm:$0xff] %v299
    %311 = vst [vmem:[#allocation5 + $0x158] sm:$0xff] %v299
    %312 = vst [vmem:[#allocation5 + $0x1d0] sm:$0xff] %v304
    %313 = vst [vmem:[#allocation5 + $0x1d8] sm:$0xff] %v304
    %314 = vst [vmem:[#allocation5 + $0x250] sm:$0xff] %v26
    %315 = vst [vmem:[#allocation5 + $0x258] sm:$0xff] %v27
    %316 = vst [vmem:[#allocation5 + $0x2d0] sm:$0xff] %v28
    %317 = vst [vmem:[#allocation5 + $0x2d8] sm:$0xff] %v29
    %318 = vst [vmem:[#allocation5 + $0x350] sm:$0xff] %v30
    %319 = vst [vmem:[#allocation5 + $0x358] sm:$0xff] %v31
    %320 = vst [vmem:[#allocation5 + $0x3d0] sm:$0xff] %v32
    %321 = vst [vmem:[#allocation5 + $0x3d8] sm:$0xff] %v33
    %322 = vst [vmem:[#allocation5 + $0x450] sm:$0xff] %v34
    %323 = vst [vmem:[#allocation5 + $0x458] sm:$0xff] %v35
    %324 = vst [vmem:[#allocation5 + $0x4d0] sm:$0xff] %v36
    %325 = vst [vmem:[#allocation5 + $0x4d8] sm:$0xff] %v37
    %326 = vst [vmem:[#allocation5 + $0x550] sm:$0xff] %v38
    %327 = vst [vmem:[#allocation5 + $0x558] sm:$0xff] %v39
    %328 = vst [vmem:[#allocation5 + $0x5d0] sm:$0xff] %v40
    %329 = vst [vmem:[#allocation5 + $0x5d8] sm:$0xff] %v41
    %v330 = vld [vmem:[%s0] sm:$0xff]
    %v331 = vld [vmem:[%s0 + $0x8] sm:$0xff]
    %v332 = vld [vmem:[%s0 + $0x10] sm:$0xff]
    %v333 = vld [vmem:[%s0 + $0x18] sm:$0xff]
    %335 = vset.pattern.permute.xlu0 6
    %336 = vperm.xlu0 %335, %v330
    %v337 = vpop.permute.xlu0 %336
    %340 = vset.pattern.permute.xlu0 6
    %341 = vperm.xlu0 %340, %v331
    %v342 = vpop.permute.xlu0 %341
    %345 = vset.pattern.permute.xlu0 6
    %346 = vperm.xlu0 %345, %v332
    %v347 = vpop.permute.xlu0 %346
    %350 = vset.pattern.permute.xlu0 6
    %351 = vperm.xlu0 %350, %v333
    %v352 = vpop.permute.xlu0 %351
    %354 = vst [vmem:[#allocation5 + $0x60] sm:$0xff] %v337
    %355 = vst [vmem:[#allocation5 + $0x68] sm:$0xff] %v337
    %356 = vst [vmem:[#allocation5 + $0xe0] sm:$0xff] %v342
    %357 = vst [vmem:[#allocation5 + $0xe8] sm:$0xff] %v342
    %358 = vst [vmem:[#allocation5 + $0x160] sm:$0xff] %v347
    %359 = vst [vmem:[#allocation5 + $0x168] sm:$0xff] %v347
    %360 = vst [vmem:[#allocation5 + $0x1e0] sm:$0xff] %v352
    %361 = vst [vmem:[#allocation5 + $0x1e8] sm:$0xff] %v352
    %362 = vst [vmem:[#allocation5 + $0x260] sm:$0xff] %v26
    %363 = vst [vmem:[#allocation5 + $0x268] sm:$0xff] %v27
    %364 = vst [vmem:[#allocation5 + $0x2e0] sm:$0xff] %v28
    %365 = vst [vmem:[#allocation5 + $0x2e8] sm:$0xff] %v29
    %366 = vst [vmem:[#allocation5 + $0x360] sm:$0xff] %v30
    %367 = vst [vmem:[#allocation5 + $0x368] sm:$0xff] %v31
    %368 = vst [vmem:[#allocation5 + $0x3e0] sm:$0xff] %v32
    %369 = vst [vmem:[#allocation5 + $0x3e8] sm:$0xff] %v33
    %370 = vst [vmem:[#allocation5 + $0x460] sm:$0xff] %v34
    %371 = vst [vmem:[#allocation5 + $0x468] sm:$0xff] %v35
    %372 = vst [vmem:[#allocation5 + $0x4e0] sm:$0xff] %v36
    %373 = vst [vmem:[#allocation5 + $0x4e8] sm:$0xff] %v37
    %374 = vst [vmem:[#allocation5 + $0x560] sm:$0xff] %v38
    %375 = vst [vmem:[#allocation5 + $0x568] sm:$0xff] %v39
    %376 = vst [vmem:[#allocation5 + $0x5e0] sm:$0xff] %v40
    %377 = vst [vmem:[#allocation5 + $0x5e8] sm:$0xff] %v41
    %v378 = vld [vmem:[%s0] sm:$0xff]
    %v379 = vld [vmem:[%s0 + $0x8] sm:$0xff]
    %v380 = vld [vmem:[%s0 + $0x10] sm:$0xff]
    %v381 = vld [vmem:[%s0 + $0x18] sm:$0xff]
    %383 = vset.pattern.permute.xlu0 7
    %384 = vperm.xlu0 %383, %v378
    %v385 = vpop.permute.xlu0 %384
    %388 = vset.pattern.permute.xlu0 7
    %389 = vperm.xlu0 %388, %v379
    %v390 = vpop.permute.xlu0 %389
    %393 = vset.pattern.permute.xlu0 7
    %394 = vperm.xlu0 %393, %v380
    %v395 = vpop.permute.xlu0 %394
    %398 = vset.pattern.permute.xlu0 7
    %399 = vperm.xlu0 %398, %v381
    %v400 = vpop.permute.xlu0 %399
    %402 = vst [vmem:[#allocation5 + $0x70] sm:$0xff] %v385
    %403 = vst [vmem:[#allocation5 + $0x78] sm:$0xff] %v385
    %404 = vst [vmem:[#allocation5 + $0xf0] sm:$0xff] %v390
    %405 = vst [vmem:[#allocation5 + $0xf8] sm:$0xff] %v390
    %406 = vst [vmem:[#allocation5 + $0x170] sm:$0xff] %v395
    %407 = vst [vmem:[#allocation5 + $0x178] sm:$0xff] %v395
    %408 = vst [vmem:[#allocation5 + $0x1f0] sm:$0xff] %v400
    %409 = vst [vmem:[#allocation5 + $0x1f8] sm:$0xff] %v400
    %410 = vst [vmem:[#allocation5 + $0x270] sm:$0xff] %v26
    %411 = vst [vmem:[#allocation5 + $0x278] sm:$0xff] %v27
    %412 = vst [vmem:[#allocation5 + $0x2f0] sm:$0xff] %v28
    %413 = vst [vmem:[#allocation5 + $0x2f8] sm:$0xff] %v29
    %414 = vst [vmem:[#allocation5 + $0x370] sm:$0xff] %v30
    %415 = vst [vmem:[#allocation5 + $0x378] sm:$0xff] %v31
    %416 = vst [vmem:[#allocation5 + $0x3f0] sm:$0xff] %v32
    %417 = vst [vmem:[#allocation5 + $0x3f8] sm:$0xff] %v33
    %418 = vst [vmem:[#allocation5 + $0x470] sm:$0xff] %v34
    %419 = vst [vmem:[#allocation5 + $0x478] sm:$0xff] %v35
    %420 = vst [vmem:[#allocation5 + $0x4f0] sm:$0xff] %v36
    %421 = vst [vmem:[#allocation5 + $0x4f8] sm:$0xff] %v37
    %422 = vst [vmem:[#allocation5 + $0x570] sm:$0xff] %v38
    %423 = vst [vmem:[#allocation5 + $0x578] sm:$0xff] %v39
    %424 = vst [vmem:[#allocation5 + $0x5f0] sm:$0xff] %v40
    %425 = vst [vmem:[#allocation5 + $0x5f8] sm:$0xff] %v41
    // Predicated region
    $region14: #{tpu_custom_call.1} parent=1 // pred_check
      _
    $region15: #{tpu_custom_call.1} parent=1 // pred_check_branch
      %427 = sbr.rel (0) target = $region17
    $region16: #{tpu_custom_call.1} parent=1 // pred_region
      %s429 = ssub.s32 24576, 24576
      %430 = vsyncadd [#allocation4], %s429
      %s431 = sshll.u32 [#allocation5], 4
      %s432 = int_to_ptr.vmem [resolvable:$true] %s431
      %437 = dma.vmem_to_hbm [thread:$0]  %s432, 24576, %s2, [#allocation4], 2048, 2048, 128
    $region17: #{tpu_custom_call.1} parent=1 // pred_fallthru
      _
    // Predicated region
    $region18: #{tpu_custom_call.1} parent=1 // pred_check
      _
    $region19: #{tpu_custom_call.1} parent=1 // pred_check_branch
      %439 = sbr.rel (0) target = $region21
    $region20: #{tpu_custom_call.1} parent=1 // pred_region
      %440 = dma.done [#allocation4], 24576
    $region21: #{tpu_custom_call.1} parent=1 // pred_fallthru
      _
    %441 = vsyncpa [#allocation3], 1
    %442 = vsyncpa [#allocation4], 1

</llo_original>
